<compile_context>
chip_gen: v5e
topology: v5e:2x2
jax: 0.10.0
libtpu: 0.0.40
codegen_flags: <defaults>
</compile_context>

<pallas_src>
import jax
import jax.numpy as jnp
from jax.experimental import pallas as pl
from jax.experimental.pallas import tpu as pltpu

INPUT = 1000      # logical input features (PyTorch model)
INPUT_P = 1024    # padded input features (lane-dense, multiple of 128)
HIDDEN = 100      # logical hidden features
HP = 128          # padded hidden features (full lane width)
OUTPUT = 2
TB_MAX = 1024     # batch tile (multiple of 8); 2048 also fits VMEM on v6e/v7x


def mlp_kernel(x_ref, w1_ref, b1_ref, w2_ref, b2_ref, w3_ref, b3_ref, o_ref):
    # Layer 1: (TB, INPUT_P) bf16 @ (INPUT_P, HP) bf16 -> f32 acc, bias+relu in f32.
    h1 = jnp.dot(x_ref[...], w1_ref[...], preferred_element_type=jnp.float32)
    h1 = jnp.maximum(h1 + b1_ref[...], 0.0)

    # Layer 2: (TB, HP) @ (HP, HP)
    h2 = jnp.dot(h1.astype(jnp.bfloat16), w2_ref[...],
                 preferred_element_type=jnp.float32)
    h2 = jnp.maximum(h2 + b2_ref[...], 0.0)

    # Layer 3: (TB, HP) @ (HP, OUTPUT)  (no activation)
    # Output is lane-sparse (2/128 lanes) but only ~8 B/row of writeback,
    # fully hidden under the x-tile DMA -> not worth the padded-store variant.
    h3 = jnp.dot(h2.astype(jnp.bfloat16), w3_ref[...],
                 preferred_element_type=jnp.float32)
    o_ref[...] = (h3 + b3_ref[...]).astype(o_ref.dtype)


def prepare_input(x):
    """Producer-side layout: zero-pad features 1000->1024 and cast to bf16.

    In a real pipeline this belongs in whatever produces x (a one-time layout
    choice), not on the per-call hot path of the kernel wrapper.
    """
    b, f = x.shape
    assert f in (INPUT, INPUT_P), f
    if f == INPUT:
        x = jnp.pad(x, ((0, 0), (0, INPUT_P - INPUT)))
    return x.astype(jnp.bfloat16)


def mlp_forward(x, params):
    """x: (B, INPUT_P) bfloat16 (see prepare_input). Returns (B, OUTPUT) f32."""
    B, F = x.shape
    assert F == INPUT_P, f"expected padded input width {INPUT_P}, got {F}"
    assert x.dtype == jnp.bfloat16, x.dtype

    w1, b1 = params["w1"], params["b1"]
    w2, b2 = params["w2"], params["b2"]
    w3, b3 = params["w3"], params["b3"]

    # Batch tile: multiple of 8, capped at TB_MAX. No wrapper-side padding of x;
    # Pallas masks the ragged last block and the (B, 2) output never sees it.
    tb = min(TB_MAX, ((B + 7) // 8) * 8)
    grid = (pl.cdiv(B, tb),)

    # Weights/biases: constant block index -> fetched once, resident in VMEM.
    def resident(a):
        return pl.BlockSpec(a.shape, lambda i: (0,) * a.ndim)

    flops = 2 * B * (INPUT_P * HP + HP * HP + HP * OUTPUT)
    bytes_accessed = (
        B * INPUT_P * 2                                            # bf16 x
        + sum(int(p.size) * p.dtype.itemsize for p in params.values())
        + B * OUTPUT * 4                                           # f32 out
    )

    out = pl.pallas_call(
        mlp_kernel,
        out_shape=jax.ShapeDtypeStruct((B, OUTPUT), jnp.float32),
        grid=grid,
        in_specs=[
            pl.BlockSpec((tb, INPUT_P), lambda i: (i, 0)),   # x: moves with batch tile
            resident(w1), resident(b1),
            resident(w2), resident(b2),
            resident(w3), resident(b3),
        ],
        out_specs=pl.BlockSpec((tb, OUTPUT), lambda i: (i, 0)),
        compiler_params=pltpu.CompilerParams(
            # Megacore-shards the batch tiles across TensorCores where supported.
            dimension_semantics=("parallel",),
        ),
        cost_estimate=pl.CostEstimate(
            flops=flops, transcendentals=0, bytes_accessed=bytes_accessed),
    )(x, w1, b1, w2, b2, w3, b3)

    return out


def init_params(key):
    """nn.Linear-style U(-1/sqrt(fan_in), 1/sqrt(fan_in)) init, padded for the TPU.

    Weights stored as (fan_in, fan_out) bf16 with INPUT padded to 1024 and
    HIDDEN padded to 128; biases f32 (1, fan_out_padded). Padded rows/cols are
    zero, so padded lanes carry exact zeros through bias + ReLU.
    """
    ks = jax.random.split(key, 6)

    def linear(kw, kb, fan_in, fan_out):
        bound = 1.0 / jnp.sqrt(float(fan_in))
        w = jax.random.uniform(kw, (fan_in, fan_out), jnp.float32, -bound, bound)
        b = jax.random.uniform(kb, (1, fan_out), jnp.float32, -bound, bound)
        return w, b

    w1, b1 = linear(ks[0], ks[1], INPUT, HIDDEN)
    w2, b2 = linear(ks[2], ks[3], HIDDEN, HIDDEN)
    w3, b3 = linear(ks[4], ks[5], HIDDEN, OUTPUT)

    w1p = jnp.pad(w1, ((0, INPUT_P - INPUT), (0, HP - HIDDEN)))
    b1p = jnp.pad(b1, ((0, 0), (0, HP - HIDDEN)))
    w2p = jnp.pad(w2, ((0, HP - HIDDEN), (0, HP - HIDDEN)))
    b2p = jnp.pad(b2, ((0, 0), (0, HP - HIDDEN)))
    w3p = jnp.pad(w3, ((0, HP - HIDDEN), (0, 0)))

    return {
        "w1": w1p.astype(jnp.bfloat16), "b1": b1p,
        "w2": w2p.astype(jnp.bfloat16), "b2": b2p,
        "w3": w3p.astype(jnp.bfloat16), "b3": b3,
    }


def mlp_reference(x_padded_bf16, p):
    """f32 reference mimicking the kernel's bf16 operand rounding."""
    f32 = lambda a: a.astype(jnp.float32)
    bf = lambda a: a.astype(jnp.bfloat16).astype(jnp.float32)
    hi = jax.lax.Precision.HIGHEST
    x = f32(x_padded_bf16)
    h1 = jnp.maximum(jnp.dot(x, f32(p["w1"]), precision=hi) + p["b1"], 0.0)
    h2 = jnp.maximum(jnp.dot(bf(h1), f32(p["w2"]), precision=hi) + p["b2"], 0.0)
    return jnp.dot(bf(h2), f32(p["w3"]), precision=hi) + p["b3"]


if __name__ == "__main__":
    key = jax.random.PRNGKey(0)
    k_x, k_p = jax.random.split(key)

    B = 8
    x_raw = jax.random.normal(k_x, (B, INPUT), jnp.float32)
    params = init_params(k_p)

    # "Producer" emits the kernel layout: (B, 1024) bf16, zero-padded features.
    x = prepare_input(x_raw)

    out = mlp_forward(x, params)
    out = jax.block_until_ready(out)

    ref = mlp_reference(x, params)
    assert out.shape == (B, OUTPUT), out.shape
    assert jnp.allclose(out, ref, atol=2e-2, rtol=2e-2), "mismatch vs reference"

    print("KERNEL_OK")
</pallas_src>

<mosaic_0001>
module attributes {stable_mosaic.version = 11 : i64} {
  func.func @mlp_kernel(%arg0: i32, %arg1: memref<8x1024xbf16, #tpu.memory_space<vmem>>, %arg2: memref<1024x128xbf16, #tpu.memory_space<vmem>>, %arg3: memref<1x128xf32, #tpu.memory_space<vmem>>, %arg4: memref<128x128xbf16, #tpu.memory_space<vmem>>, %arg5: memref<1x128xf32, #tpu.memory_space<vmem>>, %arg6: memref<128x2xbf16, #tpu.memory_space<vmem>>, %arg7: memref<1x2xf32, #tpu.memory_space<vmem>>, %arg8: memref<8x2xf32, #tpu.memory_space<vmem>>) attributes {dimension_semantics = [#tpu.dimension_semantics<parallel>], iteration_bounds = array<i64: 1>, scalar_prefetch = 0 : i64, scratch_operands = 0 : i64, tpu.core_type = #tpu.core_type<tc>, window_params = [{transform_indices = @transform_0, window_bounds = array<i64: 8, 1024>}, {pipeline_mode = #tpu.pipeline_mode<synchronous>, transform_indices = @transform_1, window_bounds = array<i64: 1024, 128>}, {pipeline_mode = #tpu.pipeline_mode<synchronous>, transform_indices = @transform_2, window_bounds = array<i64: 1, 128>}, {pipeline_mode = #tpu.pipeline_mode<synchronous>, transform_indices = @transform_3, window_bounds = array<i64: 128, 128>}, {pipeline_mode = #tpu.pipeline_mode<synchronous>, transform_indices = @transform_4, window_bounds = array<i64: 1, 128>}, {pipeline_mode = #tpu.pipeline_mode<synchronous>, transform_indices = @transform_5, window_bounds = array<i64: 128, 2>}, {pipeline_mode = #tpu.pipeline_mode<synchronous>, transform_indices = @transform_6, window_bounds = array<i64: 1, 2>}, {transform_indices = @transform_7, window_bounds = array<i64: 8, 2>}]} {
    %c0 = arith.constant 0 : index
    %c0_0 = arith.constant 0 : index
    %0 = vector.load %arg1[%c0, %c0_0] : memref<8x1024xbf16, #tpu.memory_space<vmem>>, vector<8x1024xbf16>
    %c0_1 = arith.constant 0 : index
    %c0_2 = arith.constant 0 : index
    %1 = vector.load %arg2[%c0_1, %c0_2] : memref<1024x128xbf16, #tpu.memory_space<vmem>>, vector<1024x128xbf16>
    %cst = arith.constant dense<0.000000e+00> : vector<8x128xf32>
    %2 = tpu.matmul %0, %1, %cst {dimension_numbers = #tpu.dot_dimension_numbers<[1], [0], [0], [1], [0, 0, 1, 1], [], []>} : vector<8x1024xbf16>, vector<1024x128xbf16>, vector<8x128xf32> -> vector<8x128xf32>
    %c0_3 = arith.constant 0 : index
    %c0_4 = arith.constant 0 : index
    %3 = vector.load %arg3[%c0_3, %c0_4] : memref<1x128xf32, #tpu.memory_space<vmem>>, vector<1x128xf32>
    %4 = vector.broadcast %3 : vector<1x128xf32> to vector<8x128xf32>
    %5 = arith.addf %2, %4 : vector<8x128xf32>
    %cst_5 = arith.constant 0.000000e+00 : f32
    %6 = vector.broadcast %cst_5 : f32 to vector<8x128xf32>
    %7 = arith.maximumf %5, %6 : vector<8x128xf32>
    %8 = arith.truncf %7 : vector<8x128xf32> to vector<8x128xbf16>
    %c0_6 = arith.constant 0 : index
    %c0_7 = arith.constant 0 : index
    %9 = vector.load %arg4[%c0_6, %c0_7] : memref<128x128xbf16, #tpu.memory_space<vmem>>, vector<128x128xbf16>
    %cst_8 = arith.constant dense<0.000000e+00> : vector<8x128xf32>
    %10 = tpu.matmul %8, %9, %cst_8 {dimension_numbers = #tpu.dot_dimension_numbers<[1], [0], [0], [1], [0, 0, 1, 1], [], []>} : vector<8x128xbf16>, vector<128x128xbf16>, vector<8x128xf32> -> vector<8x128xf32>
    %c0_9 = arith.constant 0 : index
    %c0_10 = arith.constant 0 : index
    %11 = vector.load %arg5[%c0_9, %c0_10] : memref<1x128xf32, #tpu.memory_space<vmem>>, vector<1x128xf32>
    %12 = vector.broadcast %11 : vector<1x128xf32> to vector<8x128xf32>
    %13 = arith.addf %10, %12 : vector<8x128xf32>
    %cst_11 = arith.constant 0.000000e+00 : f32
    %14 = vector.broadcast %cst_11 : f32 to vector<8x128xf32>
    %15 = arith.maximumf %13, %14 : vector<8x128xf32>
    %16 = arith.truncf %15 : vector<8x128xf32> to vector<8x128xbf16>
    %c0_12 = arith.constant 0 : index
    %c0_13 = arith.constant 0 : index
    %17 = vector.load %arg6[%c0_12, %c0_13] : memref<128x2xbf16, #tpu.memory_space<vmem>>, vector<128x2xbf16>
    %cst_14 = arith.constant dense<0.000000e+00> : vector<8x2xf32>
    %18 = tpu.matmul %16, %17, %cst_14 {dimension_numbers = #tpu.dot_dimension_numbers<[1], [0], [0], [1], [0, 0, 1, 1], [], []>} : vector<8x128xbf16>, vector<128x2xbf16>, vector<8x2xf32> -> vector<8x2xf32>
    %c0_15 = arith.constant 0 : index
    %c0_16 = arith.constant 0 : index
    %19 = vector.load %arg7[%c0_15, %c0_16] : memref<1x2xf32, #tpu.memory_space<vmem>>, vector<1x2xf32>
    %20 = vector.broadcast %19 : vector<1x2xf32> to vector<8x2xf32>
    %21 = arith.addf %18, %20 : vector<8x2xf32>
    %c0_17 = arith.constant 0 : index
    %c0_18 = arith.constant 0 : index
    %22 = vector.load %arg8[%c0_17, %c0_18] : memref<8x2xf32, #tpu.memory_space<vmem>>, vector<8x2xf32>
    tpu.vector_store %arg8[%c0_17, %c0_18], %21 {strides = array<i32>} : memref<8x2xf32, #tpu.memory_space<vmem>>, vector<8x2xf32>,
    return
  }
  func.func @transform_0(%arg0: i32) -> (i32, i32) {
    %c0_i32 = arith.constant 0 : i32
    %c0_i32_0 = arith.constant 0 : i32
    return %arg0, %c0_i32 : i32, i32
  }
  func.func @transform_1(%arg0: i32) -> (i32, i32) {
    %c0_i32 = arith.constant 0 : i32
    %c0_i32_0 = arith.constant 0 : i32
    %c0_i32_1 = arith.constant 0 : i32
    return %c0_i32, %c0_i32_0 : i32, i32
  }
  func.func @transform_2(%arg0: i32) -> (i32, i32) {
    %c0_i32 = arith.constant 0 : i32
    %c0_i32_0 = arith.constant 0 : i32
    %c0_i32_1 = arith.constant 0 : i32
    return %c0_i32, %c0_i32_0 : i32, i32
  }
  func.func @transform_3(%arg0: i32) -> (i32, i32) {
    %c0_i32 = arith.constant 0 : i32
    %c0_i32_0 = arith.constant 0 : i32
    %c0_i32_1 = arith.constant 0 : i32
    return %c0_i32, %c0_i32_0 : i32, i32
  }
  func.func @transform_4(%arg0: i32) -> (i32, i32) {
    %c0_i32 = arith.constant 0 : i32
    %c0_i32_0 = arith.constant 0 : i32
    %c0_i32_1 = arith.constant 0 : i32
    return %c0_i32, %c0_i32_0 : i32, i32
  }
  func.func @transform_5(%arg0: i32) -> (i32, i32) {
    %c0_i32 = arith.constant 0 : i32
    %c0_i32_0 = arith.constant 0 : i32
    %c0_i32_1 = arith.constant 0 : i32
    return %c0_i32, %c0_i32_0 : i32, i32
  }
  func.func @transform_6(%arg0: i32) -> (i32, i32) {
    %c0_i32 = arith.constant 0 : i32
    %c0_i32_0 = arith.constant 0 : i32
    %c0_i32_1 = arith.constant 0 : i32
    return %c0_i32, %c0_i32_0 : i32, i32
  }
  func.func @transform_7(%arg0: i32) -> (i32, i32) {
    %c0_i32 = arith.constant 0 : i32
    %c0_i32_0 = arith.constant 0 : i32
    return %arg0, %c0_i32 : i32, i32
  }
}

</mosaic_0001>

<llo_original>
// kernel: tpu_custom_call.1
$region0: #{tpu_custom_call.1}
  #allocation0 [shape = 'u32[]', space=smem, size = 0x4, offset = 0x4, fixed_abs, tag = 'smem constant byte address 0x4 - core index']
  #allocation1 [shape = 'u32[72,128]{1,0:T(1,128)}', space=vmem, size = 0x9000, scoped, tag = 'internal scratch']
  %s0 = inlined_call_operand.hbm [shape: bf16[8,1024], index: 0, kind: input, shape index: {}]
  %s1 = inlined_call_operand.hbm [shape: bf16[1024,128], index: 1, kind: input, shape index: {}]
  %s2 = inlined_call_operand.vmem [shape: f32[1,128], index: 2, kind: input, shape index: {}]
  %s3 = inlined_call_operand.vmem [shape: bf16[128,128], index: 3, kind: input, shape index: {}]
  %s4 = inlined_call_operand.vmem [shape: f32[1,128], index: 4, kind: input, shape index: {}]
  %s5 = inlined_call_operand.vmem [shape: bf16[128,2], index: 5, kind: input, shape index: {}]
  %s6 = inlined_call_operand.vmem [shape: f32[1,2], index: 6, kind: input, shape index: {}]
  %s7 = inlined_call_operand.vmem [shape: f32[8,2], index: 7, kind: output, shape index: {}]
  %s8 = sld [smem:[#allocation0]]
  $region46: #{tpu_custom_call.1} parent=0
    _
  %s10 = ssub.s32 1, %s8
  %s11 = scalar_select 0, %s10, %s8
  $region1: #{tpu_custom_call.1} parent=0
    #allocation2 [shape = 'u8[16384]{0}', space=vmem, size = 0x4000, scoped, tag = 'input window, operand 0, single buffered']
    #allocation3 [shape = 's32[1]{0}', space=sflag, size = 0x4, scoped, tag = 'scoped memory for tpu_custom_call.1']
    #allocation4 [shape = 'u8[262144]{0}', space=vmem, size = 0x40000, scoped, tag = 'input window, operand 1, single buffered']
    #allocation5 [shape = 's32[1]{0}', space=sflag, size = 0x4, scoped, tag = 'scoped memory for tpu_custom_call.1']
    %12 = vsyncpa [#allocation3], 0
    %13 = vsyncpa [#allocation5], 0
    // Predicated region
    $region2: #{tpu_custom_call.1} parent=1 // pred_check
      _
    $region3: #{tpu_custom_call.1} parent=1 // pred_check_branch
      %15 = sbr.rel (0) target = $region5
    $region4: #{tpu_custom_call.1} parent=1 // pred_region
      %17 = vsyncadd [#allocation3], 0
      %s19 = sshll.u32 %s0, 4
      %s20 = int_to_ptr.hbm [resolvable:$true] %s19
      %s21 = sshll.u32 [#allocation2], 4
      %s22 = int_to_ptr.vmem [resolvable:$true] %s21
      %24 = dma.hbm_to_vmem [thread:$0]  %s20, 512, %s22, [#allocation3]
    $region5: #{tpu_custom_call.1} parent=1 // pred_fallthru
      _
    // Predicated region
    $region6: #{tpu_custom_call.1} parent=1 // pred_check
      _
    $region7: #{tpu_custom_call.1} parent=1 // pred_check_branch
      %26 = sbr.rel (0) target = $region9
    $region8: #{tpu_custom_call.1} parent=1 // pred_region
      %28 = vsyncadd [#allocation5], 0
      %s29 = sshll.u32 %s1, 4
      %s30 = int_to_ptr.hbm [resolvable:$true] %s29
      %s31 = sshll.u32 [#allocation4], 4
      %s32 = int_to_ptr.vmem [resolvable:$true] %s31
      %37 = dma.hbm_to_vmem [thread:$0]  %s30, 8192, %s32, [#allocation5], 64, 64, 4
    $region9: #{tpu_custom_call.1} parent=1 // pred_fallthru
      _
    // Predicated region
    $region10: #{tpu_custom_call.1} parent=1 // pred_check
      _
    $region11: #{tpu_custom_call.1} parent=1 // pred_check_branch
      %39 = sbr.rel (0) target = $region13
    $region12: #{tpu_custom_call.1} parent=1 // pred_region
      _
    $region13: #{tpu_custom_call.1} parent=1 // pred_fallthru
      _
    // Predicated region
    $region14: #{tpu_custom_call.1} parent=1 // pred_check
      _
    $region15: #{tpu_custom_call.1} parent=1 // pred_check_branch
      %41 = sbr.rel (0) target = $region17
    $region16: #{tpu_custom_call.1} parent=1 // pred_region
      _
    $region17: #{tpu_custom_call.1} parent=1 // pred_fallthru
      _
    // Predicated region
    $region18: #{tpu_custom_call.1} parent=1 // pred_check
      _
    $region19: #{tpu_custom_call.1} parent=1 // pred_check_branch
      %43 = sbr.rel (0) target = $region21
    $region20: #{tpu_custom_call.1} parent=1 // pred_region
      _
    $region21: #{tpu_custom_call.1} parent=1 // pred_fallthru
      _
    // Predicated region
    $region22: #{tpu_custom_call.1} parent=1 // pred_check
      _
    $region23: #{tpu_custom_call.1} parent=1 // pred_check_branch
      %45 = sbr.rel (0) target = $region25
    $region24: #{tpu_custom_call.1} parent=1 // pred_region
      _
    $region25: #{tpu_custom_call.1} parent=1 // pred_fallthru
      _
    // Predicated region
    $region26: #{tpu_custom_call.1} parent=1 // pred_check
      _
    $region27: #{tpu_custom_call.1} parent=1 // pred_check_branch
      %47 = sbr.rel (0) target = $region29
    $region28: #{tpu_custom_call.1} parent=1 // pred_region
      _
    $region29: #{tpu_custom_call.1} parent=1 // pred_fallthru
      _
    // Predicated region
    $region30: #{tpu_custom_call.1} parent=1 // pred_check
      _
    $region31: #{tpu_custom_call.1} parent=1 // pred_check_branch
      %49 = sbr.rel (0) target = $region33
    $region32: #{tpu_custom_call.1} parent=1 // pred_region
      %51 = dma.done [#allocation3], 512
    $region33: #{tpu_custom_call.1} parent=1 // pred_fallthru
      _
    // Predicated region
    $region34: #{tpu_custom_call.1} parent=1 // pred_check
      _
    $region35: #{tpu_custom_call.1} parent=1 // pred_check_branch
      %53 = sbr.rel (0) target = $region37
    $region36: #{tpu_custom_call.1} parent=1 // pred_region
      %55 = dma.done [#allocation5], 8192
    $region37: #{tpu_custom_call.1} parent=1 // pred_fallthru
      _
    %v56 = vld [vmem:[#allocation2] sm:$0xff]
    %v57 = vld [vmem:[#allocation2 + $0x8] sm:$0xff]
    %v58 = vld [vmem:[#allocation2 + $0x10] sm:$0xff]
    %v59 = vld [vmem:[#allocation2 + $0x18] sm:$0xff]
    %v60 = vld [vmem:[#allocation4] sm:$0xf]
    %v61 = vld [vmem:[#allocation4 + $0x4] sm:$0xf]
    %v62 = vld [vmem:[#allocation4 + $0x8] sm:$0xf]
    %v63 = vld [vmem:[#allocation4 + $0xc] sm:$0xf]
    %v64 = vld [vmem:[#allocation4 + $0x10] sm:$0xf]
    %v65 = vld [vmem:[#allocation4 + $0x14] sm:$0xf]
    %v66 = vld [vmem:[#allocation4 + $0x18] sm:$0xf]
    %v67 = vld [vmem:[#allocation4 + $0x1c] sm:$0xf]
    %v68 = vld [vmem:[#allocation4 + $0x20] sm:$0xf]
    %v69 = vld [vmem:[#allocation4 + $0x24] sm:$0xf]
    %v70 = vld [vmem:[#allocation4 + $0x28] sm:$0xf]
    %v71 = vld [vmem:[#allocation4 + $0x2c] sm:$0xf]
    %v72 = vld [vmem:[#allocation4 + $0x30] sm:$0xf]
    %v73 = vld [vmem:[#allocation4 + $0x34] sm:$0xf]
    %v74 = vld [vmem:[#allocation4 + $0x38] sm:$0xf]
    %v75 = vld [vmem:[#allocation4 + $0x3c] sm:$0xf]
    %v76 = vld [vmem:[#allocation4 + $0x40] sm:$0xf]
    %v77 = vld [vmem:[#allocation4 + $0x44] sm:$0xf]
    %v78 = vld [vmem:[#allocation4 + $0x48] sm:$0xf]
    %v79 = vld [vmem:[#allocation4 + $0x4c] sm:$0xf]
    %v80 = vld [vmem:[#allocation4 + $0x50] sm:$0xf]
    %v81 = vld [vmem:[#allocation4 + $0x54] sm:$0xf]
    %v82 = vld [vmem:[#allocation4 + $0x58] sm:$0xf]
    %v83 = vld [vmem:[#allocation4 + $0x5c] sm:$0xf]
    %v84 = vld [vmem:[#allocation4 + $0x60] sm:$0xf]
    %v85 = vld [vmem:[#allocation4 + $0x64] sm:$0xf]
    %v86 = vld [vmem:[#allocation4 + $0x68] sm:$0xf]
    %v87 = vld [vmem:[#allocation4 + $0x6c] sm:$0xf]
    %v88 = vld [vmem:[#allocation4 + $0x70] sm:$0xf]
    %v89 = vld [vmem:[#allocation4 + $0x74] sm:$0xf]
    %v90 = vld [vmem:[#allocation4 + $0x78] sm:$0xf]
    %v91 = vld [vmem:[#allocation4 + $0x7c] sm:$0xf]
    %v92 = vld [vmem:[#allocation4 + $0x80] sm:$0xf]
    %v93 = vld [vmem:[#allocation4 + $0x84] sm:$0xf]
    %v94 = vld [vmem:[#allocation4 + $0x88] sm:$0xf]
    %v95 = vld [vmem:[#allocation4 + $0x8c] sm:$0xf]
    %v96 = vld [vmem:[#allocation4 + $0x90] sm:$0xf]
    %v97 = vld [vmem:[#allocation4 + $0x94] sm:$0xf]
    %v98 = vld [vmem:[#allocation4 + $0x98] sm:$0xf]
    %v99 = vld [vmem:[#allocation4 + $0x9c] sm:$0xf]
    %v100 = vld [vmem:[#allocation4 + $0xa0] sm:$0xf]
    %v101 = vld [vmem:[#allocation4 + $0xa4] sm:$0xf]
    %v102 = vld [vmem:[#allocation4 + $0xa8] sm:$0xf]
    %v103 = vld [vmem:[#allocation4 + $0xac] sm:$0xf]
    %v104 = vld [vmem:[#allocation4 + $0xb0] sm:$0xf]
    %v105 = vld [vmem:[#allocation4 + $0xb4] sm:$0xf]
    %v106 = vld [vmem:[#allocation4 + $0xb8] sm:$0xf]
    %v107 = vld [vmem:[#allocation4 + $0xbc] sm:$0xf]
    %v108 = vld [vmem:[#allocation4 + $0xc0] sm:$0xf]
    %v109 = vld [vmem:[#allocation4 + $0xc4] sm:$0xf]
    %v110 = vld [vmem:[#allocation4 + $0xc8] sm:$0xf]
    %v111 = vld [vmem:[#allocation4 + $0xcc] sm:$0xf]
    %v112 = vld [vmem:[#allocation4 + $0xd0] sm:$0xf]
    %v113 = vld [vmem:[#allocation4 + $0xd4] sm:$0xf]
    %v114 = vld [vmem:[#allocation4 + $0xd8] sm:$0xf]
    %v115 = vld [vmem:[#allocation4 + $0xdc] sm:$0xf]
    %v116 = vld [vmem:[#allocation4 + $0xe0] sm:$0xf]
    %v117 = vld [vmem:[#allocation4 + $0xe4] sm:$0xf]
    %v118 = vld [vmem:[#allocation4 + $0xe8] sm:$0xf]
    %v119 = vld [vmem:[#allocation4 + $0xec] sm:$0xf]
    %v120 = vld [vmem:[#allocation4 + $0xf0] sm:$0xf]
    %v121 = vld [vmem:[#allocation4 + $0xf4] sm:$0xf]
    %v122 = vld [vmem:[#allocation4 + $0xf8] sm:$0xf]
    %v123 = vld [vmem:[#allocation4 + $0xfc] sm:$0xf]
    %v124 = vld [vmem:[#allocation4 + $0x100] sm:$0xf]
    %v125 = vld [vmem:[#allocation4 + $0x104] sm:$0xf]
    %v126 = vld [vmem:[#allocation4 + $0x108] sm:$0xf]
    %v127 = vld [vmem:[#allocation4 + $0x10c] sm:$0xf]
    %v128 = vld [vmem:[#allocation4 + $0x110] sm:$0xf]
    %v129 = vld [vmem:[#allocation4 + $0x114] sm:$0xf]
    %v130 = vld [vmem:[#allocation4 + $0x118] sm:$0xf]
    %v131 = vld [vmem:[#allocation4 + $0x11c] sm:$0xf]
    %v132 = vld [vmem:[#allocation4 + $0x120] sm:$0xf]
    %v133 = vld [vmem:[#allocation4 + $0x124] sm:$0xf]
    %v134 = vld [vmem:[#allocation4 + $0x128] sm:$0xf]
    %v135 = vld [vmem:[#allocation4 + $0x12c] sm:$0xf]
    %v136 = vld [vmem:[#allocation4 + $0x130] sm:$0xf]
    %v137 = vld [vmem:[#allocation4 + $0x134] sm:$0xf]
    %v138 = vld [vmem:[#allocation4 + $0x138] sm:$0xf]
    %v139 = vld [vmem:[#allocation4 + $0x13c] sm:$0xf]
    %v140 = vld [vmem:[#allocation4 + $0x140] sm:$0xf]
    %v141 = vld [vmem:[#allocation4 + $0x144] sm:$0xf]
    %v142 = vld [vmem:[#allocation4 + $0x148] sm:$0xf]
    %v143 = vld [vmem:[#allocation4 + $0x14c] sm:$0xf]
    %v144 = vld [vmem:[#allocation4 + $0x150] sm:$0xf]
    %v145 = vld [vmem:[#allocation4 + $0x154] sm:$0xf]
    %v146 = vld [vmem:[#allocation4 + $0x158] sm:$0xf]
    %v147 = vld [vmem:[#allocation4 + $0x15c] sm:$0xf]
    %v148 = vld [vmem:[#allocation4 + $0x160] sm:$0xf]
    %v149 = vld [vmem:[#allocation4 + $0x164] sm:$0xf]
    %v150 = vld [vmem:[#allocation4 + $0x168] sm:$0xf]
    %v151 = vld [vmem:[#allocation4 + $0x16c] sm:$0xf]
    %v152 = vld [vmem:[#allocation4 + $0x170] sm:$0xf]
    %v153 = vld [vmem:[#allocation4 + $0x174] sm:$0xf]
    %v154 = vld [vmem:[#allocation4 + $0x178] sm:$0xf]
    %v155 = vld [vmem:[#allocation4 + $0x17c] sm:$0xf]
    %v156 = vld [vmem:[#allocation4 + $0x180] sm:$0xf]
    %v157 = vld [vmem:[#allocation4 + $0x184] sm:$0xf]
    %v158 = vld [vmem:[#allocation4 + $0x188] sm:$0xf]
    %v159 = vld [vmem:[#allocation4 + $0x18c] sm:$0xf]
    %v160 = vld [vmem:[#allocation4 + $0x190] sm:$0xf]
    %v161 = vld [vmem:[#allocation4 + $0x194] sm:$0xf]
    %v162 = vld [vmem:[#allocation4 + $0x198] sm:$0xf]
    %v163 = vld [vmem:[#allocation4 + $0x19c] sm:$0xf]
    %v164 = vld [vmem:[#allocation4 + $0x1a0] sm:$0xf]
    %v165 = vld [vmem:[#allocation4 + $0x1a4] sm:$0xf]
    %v166 = vld [vmem:[#allocation4 + $0x1a8] sm:$0xf]
    %v167 = vld [vmem:[#allocation4 + $0x1ac] sm:$0xf]
    %v168 = vld [vmem:[#allocation4 + $0x1b0] sm:$0xf]
    %v169 = vld [vmem:[#allocation4 + $0x1b4] sm:$0xf]
    %v170 = vld [vmem:[#allocation4 + $0x1b8] sm:$0xf]
    %v171 = vld [vmem:[#allocation4 + $0x1bc] sm:$0xf]
    %v172 = vld [vmem:[#allocation4 + $0x1c0] sm:$0xf]
    %v173 = vld [vmem:[#allocation4 + $0x1c4] sm:$0xf]
    %v174 = vld [vmem:[#allocation4 + $0x1c8] sm:$0xf]
    %v175 = vld [vmem:[#allocation4 + $0x1cc] sm:$0xf]
    %v176 = vld [vmem:[#allocation4 + $0x1d0] sm:$0xf]
    %v177 = vld [vmem:[#allocation4 + $0x1d4] sm:$0xf]
    %v178 = vld [vmem:[#allocation4 + $0x1d8] sm:$0xf]
    %v179 = vld [vmem:[#allocation4 + $0x1dc] sm:$0xf]
    %v180 = vld [vmem:[#allocation4 + $0x1e0] sm:$0xf]
    %v181 = vld [vmem:[#allocation4 + $0x1e4] sm:$0xf]
    %v182 = vld [vmem:[#allocation4 + $0x1e8] sm:$0xf]
    %v183 = vld [vmem:[#allocation4 + $0x1ec] sm:$0xf]
    %v184 = vld [vmem:[#allocation4 + $0x1f0] sm:$0xf]
    %v185 = vld [vmem:[#allocation4 + $0x1f4] sm:$0xf]
    %v186 = vld [vmem:[#allocation4 + $0x1f8] sm:$0xf]
    %v187 = vld [vmem:[#allocation4 + $0x1fc] sm:$0xf]
    %v188 = vld [vmem:[%s2] sm:$0x1]
    %v190 = vperm.slane %v188, 0
    %v196 = vunpack.c.l.b16 %v56
    %v197 = vunpack.c.h.b16 %v56
    %v198 = vunpack.c.l.b16 %v57
    %v199 = vunpack.c.h.b16 %v57
    %v200 = vunpack.c.l.b16 %v58
    %v201 = vunpack.c.h.b16 %v58
    %v202 = vunpack.c.l.b16 %v59
    %v203 = vunpack.c.h.b16 %v59
    %v204 = vpack.c.b16 %v196, %v196
    %v205 = vpack.c.b16 %v197, %v197
    %v206 = vpack.c.b16 %v198, %v198
    %v207 = vpack.c.b16 %v199, %v199
    %v208 = vpack.c.b16 %v200, %v200
    %v209 = vpack.c.b16 %v201, %v201
    %v210 = vpack.c.b16 %v202, %v202
    %v211 = vpack.c.b16 %v203, %v203
    %v348 = vunpack.c.l.b16 %v60
    %v349 = vunpack.c.l.b16 %v61
    %v350 = vunpack.c.l.b16 %v62
    %v351 = vunpack.c.l.b16 %v63
    %v352 = vunpack.c.l.b16 %v64
    %v353 = vunpack.c.l.b16 %v65
    %v354 = vunpack.c.l.b16 %v66
    %v355 = vunpack.c.l.b16 %v67
    %v356 = vunpack.c.l.b16 %v68
    %v357 = vunpack.c.l.b16 %v69
    %v358 = vunpack.c.l.b16 %v70
    %v359 = vunpack.c.l.b16 %v71
    %v360 = vunpack.c.l.b16 %v72
    %v361 = vunpack.c.l.b16 %v73
    %v362 = vunpack.c.l.b16 %v74
    %v363 = vunpack.c.l.b16 %v75
    %v364 = vunpack.c.l.b16 %v76
    %v365 = vunpack.c.l.b16 %v77
    %v366 = vunpack.c.l.b16 %v78
    %v367 = vunpack.c.l.b16 %v79
    %v368 = vunpack.c.l.b16 %v80
    %v369 = vunpack.c.l.b16 %v81
    %v370 = vunpack.c.l.b16 %v82
    %v371 = vunpack.c.l.b16 %v83
    %v372 = vunpack.c.l.b16 %v84
    %v373 = vunpack.c.l.b16 %v85
    %v374 = vunpack.c.l.b16 %v86
    %v375 = vunpack.c.l.b16 %v87
    %v376 = vunpack.c.l.b16 %v88
    %v377 = vunpack.c.l.b16 %v89
    %v378 = vunpack.c.l.b16 %v90
    %v379 = vunpack.c.l.b16 %v91
    %v380 = vunpack.c.l.b16 %v92
    %v381 = vunpack.c.l.b16 %v93
    %v382 = vunpack.c.l.b16 %v94
    %v383 = vunpack.c.l.b16 %v95
    %v384 = vunpack.c.l.b16 %v96
    %v385 = vunpack.c.l.b16 %v97
    %v386 = vunpack.c.l.b16 %v98
    %v387 = vunpack.c.l.b16 %v99
    %v388 = vunpack.c.l.b16 %v100
    %v389 = vunpack.c.l.b16 %v101
    %v390 = vunpack.c.l.b16 %v102
    %v391 = vunpack.c.l.b16 %v103
    %v392 = vunpack.c.l.b16 %v104
    %v393 = vunpack.c.l.b16 %v105
    %v394 = vunpack.c.l.b16 %v106
    %v395 = vunpack.c.l.b16 %v107
    %v396 = vunpack.c.l.b16 %v108
    %v397 = vunpack.c.l.b16 %v109
    %v398 = vunpack.c.l.b16 %v110
    %v399 = vunpack.c.l.b16 %v111
    %v400 = vunpack.c.l.b16 %v112
    %v401 = vunpack.c.l.b16 %v113
    %v402 = vunpack.c.l.b16 %v114
    %v403 = vunpack.c.l.b16 %v115
    %v404 = vunpack.c.l.b16 %v116
    %v405 = vunpack.c.l.b16 %v117
    %v406 = vunpack.c.l.b16 %v118
    %v407 = vunpack.c.l.b16 %v119
    %v408 = vunpack.c.l.b16 %v120
    %v409 = vunpack.c.l.b16 %v121
    %v410 = vunpack.c.l.b16 %v122
    %v411 = vunpack.c.l.b16 %v123
    %v412 = vunpack.c.l.b16 %v124
    %v413 = vunpack.c.l.b16 %v125
    %v414 = vunpack.c.l.b16 %v126
    %v415 = vunpack.c.l.b16 %v127
    %v416 = vunpack.c.l.b16 %v128
    %v417 = vunpack.c.l.b16 %v129
    %v418 = vunpack.c.l.b16 %v130
    %v419 = vunpack.c.l.b16 %v131
    %v420 = vunpack.c.l.b16 %v132
    %v421 = vunpack.c.l.b16 %v133
    %v422 = vunpack.c.l.b16 %v134
    %v423 = vunpack.c.l.b16 %v135
    %v424 = vunpack.c.l.b16 %v136
    %v425 = vunpack.c.l.b16 %v137
    %v426 = vunpack.c.l.b16 %v138
    %v427 = vunpack.c.l.b16 %v139
    %v428 = vunpack.c.l.b16 %v140
    %v429 = vunpack.c.l.b16 %v141
    %v430 = vunpack.c.l.b16 %v142
    %v431 = vunpack.c.l.b16 %v143
    %v432 = vunpack.c.l.b16 %v144
    %v433 = vunpack.c.l.b16 %v145
    %v434 = vunpack.c.l.b16 %v146
    %v435 = vunpack.c.l.b16 %v147
    %v436 = vunpack.c.l.b16 %v148
    %v437 = vunpack.c.l.b16 %v149
    %v438 = vunpack.c.l.b16 %v150
    %v439 = vunpack.c.l.b16 %v151
    %v440 = vunpack.c.l.b16 %v152
    %v441 = vunpack.c.l.b16 %v153
    %v442 = vunpack.c.l.b16 %v154
    %v443 = vunpack.c.l.b16 %v155
    %v444 = vunpack.c.l.b16 %v156
    %v445 = vunpack.c.l.b16 %v157
    %v446 = vunpack.c.l.b16 %v158
    %v447 = vunpack.c.l.b16 %v159
    %v448 = vunpack.c.l.b16 %v160
    %v449 = vunpack.c.l.b16 %v161
    %v450 = vunpack.c.l.b16 %v162
    %v451 = vunpack.c.l.b16 %v163
    %v452 = vunpack.c.l.b16 %v164
    %v453 = vunpack.c.l.b16 %v165
    %v454 = vunpack.c.l.b16 %v166
    %v455 = vunpack.c.l.b16 %v167
    %v456 = vunpack.c.l.b16 %v168
    %v457 = vunpack.c.l.b16 %v169
    %v458 = vunpack.c.l.b16 %v170
    %v459 = vunpack.c.l.b16 %v171
    %v460 = vunpack.c.l.b16 %v172
    %v461 = vunpack.c.l.b16 %v173
    %v462 = vunpack.c.l.b16 %v174
    %v463 = vunpack.c.l.b16 %v175
    %v464 = vunpack.c.l.b16 %v176
    %v465 = vunpack.c.l.b16 %v177
    %v466 = vunpack.c.l.b16 %v178
    %v467 = vunpack.c.l.b16 %v179
    %v468 = vunpack.c.l.b16 %v180
    %v469 = vunpack.c.l.b16 %v181
    %v470 = vunpack.c.l.b16 %v182
    %v471 = vunpack.c.l.b16 %v183
    %v472 = vunpack.c.l.b16 %v184
    %v473 = vunpack.c.l.b16 %v185
    %v474 = vunpack.c.l.b16 %v186
    %v475 = vunpack.c.l.b16 %v187
    %v476 = vpack.c.b16 %v349, %v348
    %v477 = vpack.c.b16 %v351, %v350
    %v478 = vpack.c.b16 %v353, %v352
    %v479 = vpack.c.b16 %v355, %v354
    %v480 = vpack.c.b16 %v357, %v356
    %v481 = vpack.c.b16 %v359, %v358
    %v482 = vpack.c.b16 %v361, %v360
    %v483 = vpack.c.b16 %v363, %v362
    %v484 = vpack.c.b16 %v365, %v364
    %v485 = vpack.c.b16 %v367, %v366
    %v486 = vpack.c.b16 %v369, %v368
    %v487 = vpack.c.b16 %v371, %v370
    %v488 = vpack.c.b16 %v373, %v372
    %v489 = vpack.c.b16 %v375, %v374
    %v490 = vpack.c.b16 %v377, %v376
    %v491 = vpack.c.b16 %v379, %v378
    %v492 = vpack.c.b16 %v381, %v380
    %v493 = vpack.c.b16 %v383, %v382
    %v494 = vpack.c.b16 %v385, %v384
    %v495 = vpack.c.b16 %v387, %v386
    %v496 = vpack.c.b16 %v389, %v388
    %v497 = vpack.c.b16 %v391, %v390
    %v498 = vpack.c.b16 %v393, %v392
    %v499 = vpack.c.b16 %v395, %v394
    %v500 = vpack.c.b16 %v397, %v396
    %v501 = vpack.c.b16 %v399, %v398
    %v502 = vpack.c.b16 %v401, %v400
    %v503 = vpack.c.b16 %v403, %v402
    %v504 = vpack.c.b16 %v405, %v404
    %v505 = vpack.c.b16 %v407, %v406
    %v506 = vpack.c.b16 %v409, %v408
    %v507 = vpack.c.b16 %v411, %v410
    %v508 = vpack.c.b16 %v413, %v412
    %v509 = vpack.c.b16 %v415, %v414
    %v510 = vpack.c.b16 %v417, %v416
    %v511 = vpack.c.b16 %v419, %v418
    %v512 = vpack.c.b16 %v421, %v420
    %v513 = vpack.c.b16 %v423, %v422
    %v514 = vpack.c.b16 %v425, %v424
    %v515 = vpack.c.b16 %v427, %v426
    %v516 = vpack.c.b16 %v429, %v428
    %v517 = vpack.c.b16 %v431, %v430
    %v518 = vpack.c.b16 %v433, %v432
    %v519 = vpack.c.b16 %v435, %v434
    %v520 = vpack.c.b16 %v437, %v436
    %v521 = vpack.c.b16 %v439, %v438
    %v522 = vpack.c.b16 %v441, %v440
    %v523 = vpack.c.b16 %v443, %v442
    %v524 = vpack.c.b16 %v445, %v444
    %v525 = vpack.c.b16 %v447, %v446
    %v526 = vpack.c.b16 %v449, %v448
    %v527 = vpack.c.b16 %v451, %v450
    %v528 = vpack.c.b16 %v453, %v452
    %v529 = vpack.c.b16 %v455, %v454
    %v530 = vpack.c.b16 %v457, %v456
    %v531 = vpack.c.b16 %v459, %v458
    %v532 = vpack.c.b16 %v461, %v460
    %v533 = vpack.c.b16 %v463, %v462
    %v534 = vpack.c.b16 %v465, %v464
    %v535 = vpack.c.b16 %v467, %v466
    %v536 = vpack.c.b16 %v469, %v468
    %v537 = vpack.c.b16 %v471, %v470
    %v538 = vpack.c.b16 %v473, %v472
    %v539 = vpack.c.b16 %v475, %v474
    %604 = vmatpush.bf16.msra.mxu0 %v483
    %605 = vmatpush.bf16.msra.mxu0 %v482
    %606 = vmatpush.bf16.msra.mxu0 %v481
    %607 = vmatpush.bf16.msra.mxu0 %v480
    %608 = vmatpush.bf16.msra.mxu0 %v479
    %609 = vmatpush.bf16.msra.mxu0 %v478
    %610 = vmatpush.bf16.msra.mxu0 %v477
    %611 = vmatpush.bf16.msra.mxu0 %v476
    %612 = vmatmul.bf16.gmra.mxu0 %v204
    %v613 = vpop.f32.mrf.mxu0
    %v614 = vadd.f32 %v190, %v613
    %v615 = vpop.f32.mrf.mxu0
    %616 = vdwg.mxu0
    %617 = vmatpush.bf16.msra.mxu0 %v491
    %618 = vmatpush.bf16.msra.mxu0 %v490
    %619 = vmatpush.bf16.msra.mxu0 %v489
    %620 = vmatpush.bf16.msra.mxu0 %v488
    %621 = vmatpush.bf16.msra.mxu0 %v487
    %622 = vmatpush.bf16.msra.mxu0 %v486
    %623 = vmatpush.bf16.msra.mxu0 %v485
    %624 = vmatpush.bf16.msra.mxu0 %v484
    %625 = vmatmul.bf16.gmra.mxu0 %v205
    %v626 = vpop.f32.mrf.mxu0
    %v627 = vadd.f32 %v614, %v626
    %v628 = vpop.f32.mrf.mxu0
    %629 = vdwg.mxu0
    %630 = vmatpush.bf16.msra.mxu0 %v499
    %631 = vmatpush.bf16.msra.mxu0 %v498
    %632 = vmatpush.bf16.msra.mxu0 %v497
    %633 = vmatpush.bf16.msra.mxu0 %v496
    %634 = vmatpush.bf16.msra.mxu0 %v495
    %635 = vmatpush.bf16.msra.mxu0 %v494
    %636 = vmatpush.bf16.msra.mxu0 %v493
    %637 = vmatpush.bf16.msra.mxu0 %v492
    %638 = vmatmul.bf16.gmra.mxu0 %v206
    %v639 = vpop.f32.mrf.mxu0
    %v640 = vadd.f32 %v627, %v639
    %v641 = vpop.f32.mrf.mxu0
    %642 = vdwg.mxu0
    %643 = vmatpush.bf16.msra.mxu0 %v507
    %644 = vmatpush.bf16.msra.mxu0 %v506
    %645 = vmatpush.bf16.msra.mxu0 %v505
    %646 = vmatpush.bf16.msra.mxu0 %v504
    %647 = vmatpush.bf16.msra.mxu0 %v503
    %648 = vmatpush.bf16.msra.mxu0 %v502
    %649 = vmatpush.bf16.msra.mxu0 %v501
    %650 = vmatpush.bf16.msra.mxu0 %v500
    %651 = vmatmul.bf16.gmra.mxu0 %v207
    %v652 = vpop.f32.mrf.mxu0
    %v653 = vadd.f32 %v640, %v652
    %v654 = vpop.f32.mrf.mxu0
    %655 = vdwg.mxu0
    %656 = vmatpush.bf16.msra.mxu0 %v515
    %657 = vmatpush.bf16.msra.mxu0 %v514
    %658 = vmatpush.bf16.msra.mxu0 %v513
    %659 = vmatpush.bf16.msra.mxu0 %v512
    %660 = vmatpush.bf16.msra.mxu0 %v511
    %661 = vmatpush.bf16.msra.mxu0 %v510
    %662 = vmatpush.bf16.msra.mxu0 %v509
    %663 = vmatpush.bf16.msra.mxu0 %v508
    %664 = vmatmul.bf16.gmra.mxu0 %v208
    %v665 = vpop.f32.mrf.mxu0
    %v666 = vadd.f32 %v653, %v665
    %v667 = vpop.f32.mrf.mxu0
    %668 = vdwg.mxu0
    %669 = vmatpush.bf16.msra.mxu0 %v523
    %670 = vmatpush.bf16.msra.mxu0 %v522
    %671 = vmatpush.bf16.msra.mxu0 %v521
    %672 = vmatpush.bf16.msra.mxu0 %v520
    %673 = vmatpush.bf16.msra.mxu0 %v519
    %674 = vmatpush.bf16.msra.mxu0 %v518
    %675 = vmatpush.bf16.msra.mxu0 %v517
    %676 = vmatpush.bf16.msra.mxu0 %v516
    %677 = vmatmul.bf16.gmra.mxu0 %v209
    %v678 = vpop.f32.mrf.mxu0
    %v679 = vadd.f32 %v666, %v678
    %v680 = vpop.f32.mrf.mxu0
    %681 = vdwg.mxu0
    %682 = vmatpush.bf16.msra.mxu0 %v531
    %683 = vmatpush.bf16.msra.mxu0 %v530
    %684 = vmatpush.bf16.msra.mxu0 %v529
    %685 = vmatpush.bf16.msra.mxu0 %v528
    %686 = vmatpush.bf16.msra.mxu0 %v527
    %687 = vmatpush.bf16.msra.mxu0 %v526
    %688 = vmatpush.bf16.msra.mxu0 %v525
    %689 = vmatpush.bf16.msra.mxu0 %v524
    %690 = vmatmul.bf16.gmra.mxu0 %v210
    %v691 = vpop.f32.mrf.mxu0
    %v692 = vadd.f32 %v679, %v691
    %v693 = vpop.f32.mrf.mxu0
    %694 = vdwg.mxu0
    %695 = vmatpush.bf16.msra.mxu0 %v539
    %696 = vmatpush.bf16.msra.mxu0 %v538
    %697 = vmatpush.bf16.msra.mxu0 %v537
    %698 = vmatpush.bf16.msra.mxu0 %v536
    %699 = vmatpush.bf16.msra.mxu0 %v535
    %700 = vmatpush.bf16.msra.mxu0 %v534
    %701 = vmatpush.bf16.msra.mxu0 %v533
    %702 = vmatpush.bf16.msra.mxu0 %v532
    %703 = vmatmul.bf16.gmra.mxu0 %v211
    %v704 = vpop.f32.mrf.mxu0
    %v705 = vadd.f32 %v692, %v704
    %v706 = vpop.f32.mrf.mxu0
    %707 = vdwg.mxu0
    %v708 = vmax.f32 %v705, 0.0
    %v709 = vpack.c.bf16 %v708, %v708
    %v710 = vld [vmem:[%s3] sm:$0xf]
    %v711 = vld [vmem:[%s3 + $0x4] sm:$0xf]
    %v712 = vld [vmem:[%s3 + $0x8] sm:$0xf]
    %v713 = vld [vmem:[%s3 + $0xc] sm:$0xf]
    %v714 = vld [vmem:[%s3 + $0x10] sm:$0xf]
    %v715 = vld [vmem:[%s3 + $0x14] sm:$0xf]
    %v716 = vld [vmem:[%s3 + $0x18] sm:$0xf]
    %v717 = vld [vmem:[%s3 + $0x1c] sm:$0xf]
    %v718 = vld [vmem:[%s3 + $0x20] sm:$0xf]
    %v719 = vld [vmem:[%s3 + $0x24] sm:$0xf]
    %v720 = vld [vmem:[%s3 + $0x28] sm:$0xf]
    %v721 = vld [vmem:[%s3 + $0x2c] sm:$0xf]
    %v722 = vld [vmem:[%s3 + $0x30] sm:$0xf]
    %v723 = vld [vmem:[%s3 + $0x34] sm:$0xf]
    %v724 = vld [vmem:[%s3 + $0x38] sm:$0xf]
    %v725 = vld [vmem:[%s3 + $0x3c] sm:$0xf]
    %v726 = vld [vmem:[%s4] sm:$0x1]
    %v728 = vperm.slane %v726, 0
    %v746 = vunpack.c.l.b16 %v710
    %v747 = vunpack.c.l.b16 %v711
    %v748 = vunpack.c.l.b16 %v712
    %v749 = vunpack.c.l.b16 %v713
    %v750 = vunpack.c.l.b16 %v714
    %v751 = vunpack.c.l.b16 %v715
    %v752 = vunpack.c.l.b16 %v716
    %v753 = vunpack.c.l.b16 %v717
    %v754 = vunpack.c.l.b16 %v718
    %v755 = vunpack.c.l.b16 %v719
    %v756 = vunpack.c.l.b16 %v720
    %v757 = vunpack.c.l.b16 %v721
    %v758 = vunpack.c.l.b16 %v722
    %v759 = vunpack.c.l.b16 %v723
    %v760 = vunpack.c.l.b16 %v724
    %v761 = vunpack.c.l.b16 %v725
    %v762 = vpack.c.b16 %v747, %v746
    %v763 = vpack.c.b16 %v749, %v748
    %v764 = vpack.c.b16 %v751, %v750
    %v765 = vpack.c.b16 %v753, %v752
    %v766 = vpack.c.b16 %v755, %v754
    %v767 = vpack.c.b16 %v757, %v756
    %v768 = vpack.c.b16 %v759, %v758
    %v769 = vpack.c.b16 %v761, %v760
    %778 = vmatpush.bf16.msra.mxu0 %v769
    %779 = vmatpush.bf16.msra.mxu0 %v768
    %780 = vmatpush.bf16.msra.mxu0 %v767
    %781 = vmatpush.bf16.msra.mxu0 %v766
    %782 = vmatpush.bf16.msra.mxu0 %v765
    %783 = vmatpush.bf16.msra.mxu0 %v764
    %784 = vmatpush.bf16.msra.mxu0 %v763
    %785 = vmatpush.bf16.msra.mxu0 %v762
    %786 = vmatmul.bf16.gmra.mxu0 %v709
    %v787 = vpop.f32.mrf.mxu0
    %v788 = vadd.f32 %v728, %v787
    %v789 = vpop.f32.mrf.mxu0
    %790 = vdwg.mxu0
    %v791 = vmax.f32 %v788, 0.0
    %v792 = vpack.c.bf16 %v791, %v791
    %v793 = vld [vmem:[%s5] sm:$0xf]
    %v794 = vld [vmem:[%s5 + $0x4] sm:$0xf]
    %v795 = vld [vmem:[%s5 + $0x8] sm:$0xf]
    %v796 = vld [vmem:[%s5 + $0xc] sm:$0xf]
    %v797 = vld [vmem:[%s5 + $0x10] sm:$0xf]
    %v798 = vld [vmem:[%s5 + $0x14] sm:$0xf]
    %v799 = vld [vmem:[%s5 + $0x18] sm:$0xf]
    %v800 = vld [vmem:[%s5 + $0x1c] sm:$0xf]
    %v801 = vld [vmem:[%s5 + $0x20] sm:$0xf]
    %v802 = vld [vmem:[%s5 + $0x24] sm:$0xf]
    %v803 = vld [vmem:[%s5 + $0x28] sm:$0xf]
    %v804 = vld [vmem:[%s5 + $0x2c] sm:$0xf]
    %v805 = vld [vmem:[%s5 + $0x30] sm:$0xf]
    %v806 = vld [vmem:[%s5 + $0x34] sm:$0xf]
    %v807 = vld [vmem:[%s5 + $0x38] sm:$0xf]
    %v808 = vld [vmem:[%s5 + $0x3c] sm:$0xf]
    %v809 = vld [vmem:[%s6] sm:$0x1]
    %v811 = vperm.slane %v809, 0
    %v829 = vunpack.c.l.b16 %v793
    %v830 = vunpack.c.l.b16 %v794
    %v831 = vunpack.c.l.b16 %v795
    %v832 = vunpack.c.l.b16 %v796
    %v833 = vunpack.c.l.b16 %v797
    %v834 = vunpack.c.l.b16 %v798
    %v835 = vunpack.c.l.b16 %v799
    %v836 = vunpack.c.l.b16 %v800
    %v837 = vunpack.c.l.b16 %v801
    %v838 = vunpack.c.l.b16 %v802
    %v839 = vunpack.c.l.b16 %v803
    %v840 = vunpack.c.l.b16 %v804
    %v841 = vunpack.c.l.b16 %v805
    %v842 = vunpack.c.l.b16 %v806
    %v843 = vunpack.c.l.b16 %v807
    %v844 = vunpack.c.l.b16 %v808
    %v845 = vpack.c.b16 %v830, %v829
    %v846 = vpack.c.b16 %v832, %v831
    %v847 = vpack.c.b16 %v834, %v833
    %v848 = vpack.c.b16 %v836, %v835
    %v849 = vpack.c.b16 %v838, %v837
    %v850 = vpack.c.b16 %v840, %v839
    %v851 = vpack.c.b16 %v842, %v841
    %v852 = vpack.c.b16 %v844, %v843
    %861 = vmatpush.bf16.msra.mxu0 %v852
    %862 = vmatpush.bf16.msra.mxu0 %v851
    %863 = vmatpush.bf16.msra.mxu0 %v850
    %864 = vmatpush.bf16.msra.mxu0 %v849
    %865 = vmatpush.bf16.msra.mxu0 %v848
    %866 = vmatpush.bf16.msra.mxu0 %v847
    %867 = vmatpush.bf16.msra.mxu0 %v846
    %868 = vmatpush.bf16.msra.mxu0 %v845
    %869 = vmatmul.bf16.gmra.mxu0 %v792
    %v870 = vpop.f32.mrf.mxu0
    %v871 = vadd.f32 %v811, %v870
    %v872 = vpop.f32.mrf.mxu0
    %873 = vdwg.mxu0
    %vm874 = vcmask 15360
    %875 = vst.msk [vmem:[%s7] sm:$0xff] %vm874, %v871
    // Predicated region
    $region38: #{tpu_custom_call.1} parent=1 // pred_check
      _
    $region39: #{tpu_custom_call.1} parent=1 // pred_check_branch
      %877 = sbr.rel (0) target = $region41
    $region40: #{tpu_custom_call.1} parent=1 // pred_region
      _
    $region41: #{tpu_custom_call.1} parent=1 // pred_fallthru
      _
    // Predicated region
    $region42: #{tpu_custom_call.1} parent=1 // pred_check
      _
    $region43: #{tpu_custom_call.1} parent=1 // pred_check_branch
      %879 = sbr.rel (0) target = $region45
    $region44: #{tpu_custom_call.1} parent=1 // pred_region
      _
    $region45: #{tpu_custom_call.1} parent=1 // pred_fallthru
      _
    %880 = vsyncpa [#allocation3], 1
    %881 = vsyncpa [#allocation5], 1

</llo_original>
